<compile_context>
chip_gen: v5e
topology: v5e:2x2
jax: 0.10.0
libtpu: 0.0.40
codegen_flags: <defaults>
</compile_context>

<pallas_src>
import numpy as np
import jax
import jax.numpy as jnp
from jax.experimental import pallas as pl
from jax.experimental.pallas import tpu as pltpu

PATCH = 8
NPIX = PATCH * PATCH                   # 64 pixels per 8x8 patch
NFREQ = PATCH * (PATCH // 2 + 1)       # 40 rfft2 bins per 8x8 patch

# ---------------------------------------------------------------------------
# Fixed real DFT basis matrices (parameter-free constants, host precompute).
#   rfft2(p).re / .im = p_flat @ FRE_T / FIM_T          (64 -> 40)
#   irfft2(Y)         = Y.re @ GRE_T + Y.im @ GIM_T     (40 -> 64)
# ---------------------------------------------------------------------------
_eye_pix = np.eye(NPIX, dtype=np.float64).reshape(NPIX, PATCH, PATCH)
_F = np.fft.rfft2(_eye_pix).reshape(NPIX, NFREQ)
FRE_T = jnp.asarray(_F.real, jnp.float32)              # (64, 40)
FIM_T = jnp.asarray(_F.imag, jnp.float32)              # (64, 40)

_eye_frq = np.eye(NFREQ, dtype=np.float64).reshape(NFREQ, PATCH, PATCH // 2 + 1)
GRE_T = jnp.asarray(
    np.fft.irfft2(_eye_frq.astype(np.complex128), s=(PATCH, PATCH)).reshape(NFREQ, NPIX),
    jnp.float32)                                        # (40, 64)
GIM_T = jnp.asarray(
    np.fft.irfft2(1j * _eye_frq, s=(PATCH, PATCH)).reshape(NFREQ, NPIX),
    jnp.float32)                                        # (40, 64)


# ---------------------------------------------------------------------------
# Pallas kernel: one row-tile of flattened patch vectors times the resident
# fused transfer matrix (residual already folded into K -> pure MXU op).
# ---------------------------------------------------------------------------
def _cgf_patch_kernel(x_ref, k_ref, o_ref):
    o_ref[...] = jnp.dot(x_ref[...], k_ref[...],
                         preferred_element_type=jnp.float32)


def _round_up(n, m):
    return ((n + m - 1) // m) * m


def pallas_cgf_patches(x_patches, kmat, *, tm_target=512):
    """x_patches: (Npatch, 64*C) f32, kmat: (64*C, 64*C) f32 -> (Npatch, 64*C)."""
    M, D = x_patches.shape
    # Large, sublane-aligned row tiles; zero-pad a ragged tail instead of
    # collapsing to a single un-pipelined block.
    tm = min(tm_target, _round_up(M, 8))
    mp = _round_up(M, tm)
    if mp != M:
        x_patches = jnp.pad(x_patches, ((0, mp - M), (0, 0)))

    flops = 2 * mp * D * D
    bytes_accessed = (mp * D * 2 + D * D) * 4

    out = pl.pallas_call(
        _cgf_patch_kernel,
        out_shape=jax.ShapeDtypeStruct((mp, D), jnp.float32),
        grid=(pl.cdiv(mp, tm),),
        in_specs=[pl.BlockSpec((tm, D), lambda i: (i, 0)),   # lane-dense rows
                  pl.BlockSpec((D, D), lambda i: (0, 0))],   # K resident in VMEM
        out_specs=pl.BlockSpec((tm, D), lambda i: (i, 0)),
        input_output_aliases={0: 0},                         # reuse x buffer for out
        cost_estimate=pl.CostEstimate(flops=flops, transcendentals=0,
                                      bytes_accessed=bytes_accessed),
        compiler_params=pltpu.CompilerParams(
            dimension_semantics=("parallel",)),              # row tiles independent
    )(x_patches, kmat)
    return out[:M] if mp != M else out


# ---------------------------------------------------------------------------
# Weight preprocessing: fold conv weights + real spectral gate + residual into
# one (64*C, 64*C) matrix.
# ---------------------------------------------------------------------------
def build_fused_patch_matrix(w_in, w_out, fft_scale):
    """w_in: (C2, C), w_out: (C, C2), fft_scale: (C2,1,1,8,5) -> (64*C, 64*C)."""
    C2, C = w_in.shape
    s = fft_scale.reshape(C2, NFREQ)                                   # (C2, 40)
    # Per-channel 64x64 real gate matrices.
    gate = (jnp.einsum('qf,cf,fp->cqp', FRE_T, s, GRE_T, precision='highest')
            + jnp.einsum('qf,cf,fp->cqp', FIM_T, s, GIM_T, precision='highest'))
    # Compose with the two 1x1 convs: rows index (in-pixel q, in-chan i),
    # cols index (out-pixel p, out-chan o).
    k4 = jnp.einsum('ci,cqp,oc->qipo', w_in, gate, w_out, precision='highest')
    D = NPIX * C
    # Fold the residual (out = x @ K + x  ==  x @ (K + I)) into the matrix.
    return k4.reshape(D, D) + jnp.eye(D, dtype=jnp.float32)


# ---------------------------------------------------------------------------
# Full CGF forward (NCHW in / NCHW out, mirroring the torch module)
# ---------------------------------------------------------------------------
def cgf_forward(x_nchw, w_in, w_out, fft_scale):
    B, C, H, W = x_nchw.shape
    P = PATCH
    hb, wb = H // P, W // P
    n_patch = B * hb * wb
    D = NPIX * C

    kmat = build_fused_patch_matrix(w_in, w_out, fft_scale)           # (D, D)

    # NCHW -> (Npatch, 64*C): single transpose of the small C-channel tensor.
    xp = (x_nchw.reshape(B, C, hb, P, wb, P)
                 .transpose(0, 2, 4, 3, 5, 1)        # (B, hb, wb, p1, p2, C)
                 .reshape(n_patch, D))

    yp = pallas_cgf_patches(xp, kmat)                                  # (Npatch, D)

    return (yp.reshape(B, hb, wb, P, P, C)
              .transpose(0, 5, 1, 3, 2, 4)           # (B, C, hb, p1, wb, p2)
              .reshape(B, C, H, W))


# ---------------------------------------------------------------------------
# Plain-JAX reference (mirrors the torch forward exactly)
# ---------------------------------------------------------------------------
def reference_forward(x, w_in, w_out, fft_scale):
    B, C, H, W = x.shape
    C2 = w_in.shape[0]
    P = PATCH
    ph, pw = H // P, W // P
    hp = jnp.einsum('bchw,oc->bohw', x, w_in, precision='highest')
    xp = hp.reshape(B, C2, ph, P, pw, P).transpose(0, 1, 2, 4, 3, 5)   # b c h w p1 p2
    xf = jnp.fft.rfft2(xp)
    xf = xf * fft_scale
    yp = jnp.fft.irfft2(xf, s=(P, P))
    y = yp.transpose(0, 1, 2, 4, 3, 5).reshape(B, C2, H, W)
    out = jnp.einsum('bchw,oc->bohw', y, w_out, precision='highest')
    return out + x


if __name__ == "__main__":
    dim = 4
    ffn_expansion_factor = 3
    hidden = int(dim * ffn_expansion_factor)
    C2 = hidden * 2                                   # 24
    B, H, W = 2, 16, 16

    key = jax.random.PRNGKey(0)
    k1, k2, k3, k4 = jax.random.split(key, 4)
    w_in = 0.2 * jax.random.normal(k1, (C2, dim), jnp.float32)
    w_out = 0.2 * jax.random.normal(k2, (dim, C2), jnp.float32)
    # torch init is all-ones (gate = identity); perturb deterministically so the
    # spectral path is actually exercised.
    fft_scale = 1.0 + 0.1 * jax.random.normal(
        k3, (C2, 1, 1, PATCH, PATCH // 2 + 1), jnp.float32)
    x = jax.random.normal(k4, (B, dim, H, W), jnp.float32)

    cgf = jax.jit(cgf_forward)
    out = jax.block_until_ready(cgf(x, w_in, w_out, fft_scale))
    ref = jax.block_until_ready(reference_forward(x, w_in, w_out, fft_scale))

    assert out.shape == x.shape and out.dtype == jnp.float32
    max_err = float(jnp.max(jnp.abs(out - ref)))
    assert max_err < 3e-3, f"max abs error too large: {max_err}"
    print("KERNEL_OK")
</pallas_src>

<mosaic_0001>
module attributes {stable_mosaic.version = 11 : i64} {
  func.func @_cgf_patch_kernel(%arg0: i32, %arg1: memref<8x256xf32, #tpu.memory_space<vmem>>, %arg2: memref<256x256xf32, #tpu.memory_space<vmem>>, %arg3: memref<8x256xf32, #tpu.memory_space<vmem>>) attributes {dimension_semantics = [#tpu.dimension_semantics<parallel>], iteration_bounds = array<i64: 1>, scalar_prefetch = 0 : i64, scratch_operands = 0 : i64, tpu.core_type = #tpu.core_type<tc>, window_params = [{transform_indices = @transform_0, window_bounds = array<i64: 8, 256>}, {pipeline_mode = #tpu.pipeline_mode<synchronous>, transform_indices = @transform_1, window_bounds = array<i64: 256, 256>}, {transform_indices = @transform_2, window_bounds = array<i64: 8, 256>}]} {
    %c0 = arith.constant 0 : index
    %c0_0 = arith.constant 0 : index
    %0 = vector.load %arg1[%c0, %c0_0] : memref<8x256xf32, #tpu.memory_space<vmem>>, vector<8x256xf32>
    %c0_1 = arith.constant 0 : index
    %c0_2 = arith.constant 0 : index
    %1 = vector.load %arg2[%c0_1, %c0_2] : memref<256x256xf32, #tpu.memory_space<vmem>>, vector<256x256xf32>
    %cst = arith.constant dense<0.000000e+00> : vector<8x256xf32>
    %2 = tpu.matmul %0, %1, %cst {dimension_numbers = #tpu.dot_dimension_numbers<[1], [0], [0], [1], [0, 0, 1, 1], [], []>} : vector<8x256xf32>, vector<256x256xf32>, vector<8x256xf32> -> vector<8x256xf32>
    %c0_3 = arith.constant 0 : index
    %c0_4 = arith.constant 0 : index
    %3 = vector.load %arg3[%c0_3, %c0_4] : memref<8x256xf32, #tpu.memory_space<vmem>>, vector<8x256xf32>
    tpu.vector_store %arg3[%c0_3, %c0_4], %2 {strides = array<i32>} : memref<8x256xf32, #tpu.memory_space<vmem>>, vector<8x256xf32>,
    return
  }
  func.func @transform_0(%arg0: i32) -> (i32, i32) {
    %c0_i32 = arith.constant 0 : i32
    %c0_i32_0 = arith.constant 0 : i32
    return %arg0, %c0_i32 : i32, i32
  }
  func.func @transform_1(%arg0: i32) -> (i32, i32) {
    %c0_i32 = arith.constant 0 : i32
    %c0_i32_0 = arith.constant 0 : i32
    %c0_i32_1 = arith.constant 0 : i32
    return %c0_i32, %c0_i32_0 : i32, i32
  }
  func.func @transform_2(%arg0: i32) -> (i32, i32) {
    %c0_i32 = arith.constant 0 : i32
    %c0_i32_0 = arith.constant 0 : i32
    return %arg0, %c0_i32 : i32, i32
  }
}

</mosaic_0001>

<llo_original>
// kernel: cgf_forward.1
$region0: #{cgf_forward.1}
  #allocation0 [shape = 'u32[]', space=smem, size = 0x4, offset = 0x4, fixed_abs, tag = 'smem constant byte address 0x4 - core index']
  #allocation1 [shape = 'u32[72,128]{1,0:T(1,128)}', space=vmem, size = 0x9000, scoped, tag = 'internal scratch']
  %s0 = inlined_call_operand.vmem [shape: f32[8,256], index: 0, kind: input, shape index: {}, may-alias: {0,2}]
  %s1 = inlined_call_operand.vmem [shape: f32[256,256], index: 1, kind: input, shape index: {}]
  %s2 = inlined_call_operand.vmem [shape: f32[8,256], index: 2, kind: output, shape index: {}, may-alias: {0,2}]
  %s3 = sld [smem:[#allocation0]]
  $region18: #{cgf_forward.1} parent=0
    _
  %s5 = ssub.s32 1, %s3
  %s6 = scalar_select 0, %s5, %s3
  // Predicated region
  $region2: #{cgf_forward.1} parent=0 // pred_check
    _
  $region3: #{cgf_forward.1} parent=0 // pred_check_branch
    %8 = sbr.rel (0) target = $region5
  $region4: #{cgf_forward.1} parent=0 // pred_region
    _
  $region5: #{cgf_forward.1} parent=0 // pred_fallthru
    _
  // Predicated region
  $region6: #{cgf_forward.1} parent=0 // pred_check
    _
  $region7: #{cgf_forward.1} parent=0 // pred_check_branch
    %10 = sbr.rel (0) target = $region9
  $region8: #{cgf_forward.1} parent=0 // pred_region
    _
  $region9: #{cgf_forward.1} parent=0 // pred_fallthru
    _
  %v11 = vld [vmem:[%s0] sm:$0xff]
  %v12 = vld [vmem:[%s0 + $0x8] sm:$0xff]
  %v13 = vld [vmem:[%s1] sm:$0xff]
  %v14 = vld [vmem:[%s1 + $0x8] sm:$0xff]
  %v15 = vld [vmem:[%s1 + $0x10] sm:$0xff]
  %v16 = vld [vmem:[%s1 + $0x18] sm:$0xff]
  %v17 = vld [vmem:[%s1 + $0x20] sm:$0xff]
  %v18 = vld [vmem:[%s1 + $0x28] sm:$0xff]
  %v19 = vld [vmem:[%s1 + $0x30] sm:$0xff]
  %v20 = vld [vmem:[%s1 + $0x38] sm:$0xff]
  %v21 = vld [vmem:[%s1 + $0x40] sm:$0xff]
  %v22 = vld [vmem:[%s1 + $0x48] sm:$0xff]
  %v23 = vld [vmem:[%s1 + $0x50] sm:$0xff]
  %v24 = vld [vmem:[%s1 + $0x58] sm:$0xff]
  %v25 = vld [vmem:[%s1 + $0x60] sm:$0xff]
  %v26 = vld [vmem:[%s1 + $0x68] sm:$0xff]
  %v27 = vld [vmem:[%s1 + $0x70] sm:$0xff]
  %v28 = vld [vmem:[%s1 + $0x78] sm:$0xff]
  %v29 = vld [vmem:[%s1 + $0x80] sm:$0xff]
  %v30 = vld [vmem:[%s1 + $0x88] sm:$0xff]
  %v31 = vld [vmem:[%s1 + $0x90] sm:$0xff]
  %v32 = vld [vmem:[%s1 + $0x98] sm:$0xff]
  %v33 = vld [vmem:[%s1 + $0xa0] sm:$0xff]
  %v34 = vld [vmem:[%s1 + $0xa8] sm:$0xff]
  %v35 = vld [vmem:[%s1 + $0xb0] sm:$0xff]
  %v36 = vld [vmem:[%s1 + $0xb8] sm:$0xff]
  %v37 = vld [vmem:[%s1 + $0xc0] sm:$0xff]
  %v38 = vld [vmem:[%s1 + $0xc8] sm:$0xff]
  %v39 = vld [vmem:[%s1 + $0xd0] sm:$0xff]
  %v40 = vld [vmem:[%s1 + $0xd8] sm:$0xff]
  %v41 = vld [vmem:[%s1 + $0xe0] sm:$0xff]
  %v42 = vld [vmem:[%s1 + $0xe8] sm:$0xff]
  %v43 = vld [vmem:[%s1 + $0xf0] sm:$0xff]
  %v44 = vld [vmem:[%s1 + $0xf8] sm:$0xff]
  %v45 = vld [vmem:[%s1 + $0x100] sm:$0xff]
  %v46 = vld [vmem:[%s1 + $0x108] sm:$0xff]
  %v47 = vld [vmem:[%s1 + $0x110] sm:$0xff]
  %v48 = vld [vmem:[%s1 + $0x118] sm:$0xff]
  %v49 = vld [vmem:[%s1 + $0x120] sm:$0xff]
  %v50 = vld [vmem:[%s1 + $0x128] sm:$0xff]
  %v51 = vld [vmem:[%s1 + $0x130] sm:$0xff]
  %v52 = vld [vmem:[%s1 + $0x138] sm:$0xff]
  %v53 = vld [vmem:[%s1 + $0x140] sm:$0xff]
  %v54 = vld [vmem:[%s1 + $0x148] sm:$0xff]
  %v55 = vld [vmem:[%s1 + $0x150] sm:$0xff]
  %v56 = vld [vmem:[%s1 + $0x158] sm:$0xff]
  %v57 = vld [vmem:[%s1 + $0x160] sm:$0xff]
  %v58 = vld [vmem:[%s1 + $0x168] sm:$0xff]
  %v59 = vld [vmem:[%s1 + $0x170] sm:$0xff]
  %v60 = vld [vmem:[%s1 + $0x178] sm:$0xff]
  %v61 = vld [vmem:[%s1 + $0x180] sm:$0xff]
  %v62 = vld [vmem:[%s1 + $0x188] sm:$0xff]
  %v63 = vld [vmem:[%s1 + $0x190] sm:$0xff]
  %v64 = vld [vmem:[%s1 + $0x198] sm:$0xff]
  %v65 = vld [vmem:[%s1 + $0x1a0] sm:$0xff]
  %v66 = vld [vmem:[%s1 + $0x1a8] sm:$0xff]
  %v67 = vld [vmem:[%s1 + $0x1b0] sm:$0xff]
  %v68 = vld [vmem:[%s1 + $0x1b8] sm:$0xff]
  %v69 = vld [vmem:[%s1 + $0x1c0] sm:$0xff]
  %v70 = vld [vmem:[%s1 + $0x1c8] sm:$0xff]
  %v71 = vld [vmem:[%s1 + $0x1d0] sm:$0xff]
  %v72 = vld [vmem:[%s1 + $0x1d8] sm:$0xff]
  %v73 = vld [vmem:[%s1 + $0x1e0] sm:$0xff]
  %v74 = vld [vmem:[%s1 + $0x1e8] sm:$0xff]
  %v75 = vld [vmem:[%s1 + $0x1f0] sm:$0xff]
  %v76 = vld [vmem:[%s1 + $0x1f8] sm:$0xff]
  %77 = vmatpush.msra.mxu0 %v43
  %78 = vmatpush.msra.mxu0 %v41
  %79 = vmatpush.msra.mxu0 %v39
  %80 = vmatpush.msra.mxu0 %v37
  %81 = vmatpush.msra.mxu0 %v35
  %82 = vmatpush.msra.mxu0 %v33
  %83 = vmatpush.msra.mxu0 %v31
  %84 = vmatpush.msra.mxu0 %v29
  %85 = vmatpush.msra.mxu0 %v27
  %86 = vmatpush.msra.mxu0 %v25
  %87 = vmatpush.msra.mxu0 %v23
  %88 = vmatpush.msra.mxu0 %v21
  %89 = vmatpush.msra.mxu0 %v19
  %90 = vmatpush.msra.mxu0 %v17
  %91 = vmatpush.msra.mxu0 %v15
  %92 = vmatpush.msra.mxu0 %v13
  %93 = vmatmul.f32.gmra.mxu0 %v11
  %v94 = vpop.f32.mrf.mxu0
  %v95 = vadd.f32 0.0, %v94
  %96 = vdwg.mxu0
  %97 = vmatpush.msra.mxu0 %v75
  %98 = vmatpush.msra.mxu0 %v73
  %99 = vmatpush.msra.mxu0 %v71
  %100 = vmatpush.msra.mxu0 %v69
  %101 = vmatpush.msra.mxu0 %v67
  %102 = vmatpush.msra.mxu0 %v65
  %103 = vmatpush.msra.mxu0 %v63
  %104 = vmatpush.msra.mxu0 %v61
  %105 = vmatpush.msra.mxu0 %v59
  %106 = vmatpush.msra.mxu0 %v57
  %107 = vmatpush.msra.mxu0 %v55
  %108 = vmatpush.msra.mxu0 %v53
  %109 = vmatpush.msra.mxu0 %v51
  %110 = vmatpush.msra.mxu0 %v49
  %111 = vmatpush.msra.mxu0 %v47
  %112 = vmatpush.msra.mxu0 %v45
  %113 = vmatmul.f32.gmra.mxu0 %v12
  %v114 = vpop.f32.mrf.mxu0
  %v115 = vadd.f32 %v95, %v114
  %116 = vdwg.mxu0
  %117 = vmatpush.msra.mxu0 %v44
  %118 = vmatpush.msra.mxu0 %v42
  %119 = vmatpush.msra.mxu0 %v40
  %120 = vmatpush.msra.mxu0 %v38
  %121 = vmatpush.msra.mxu0 %v36
  %122 = vmatpush.msra.mxu0 %v34
  %123 = vmatpush.msra.mxu0 %v32
  %124 = vmatpush.msra.mxu0 %v30
  %125 = vmatpush.msra.mxu0 %v28
  %126 = vmatpush.msra.mxu0 %v26
  %127 = vmatpush.msra.mxu0 %v24
  %128 = vmatpush.msra.mxu0 %v22
  %129 = vmatpush.msra.mxu0 %v20
  %130 = vmatpush.msra.mxu0 %v18
  %131 = vmatpush.msra.mxu0 %v16
  %132 = vmatpush.msra.mxu0 %v14
  %133 = vmatmul.f32.gmra.mxu0 %v11
  %v134 = vpop.f32.mrf.mxu0
  %v135 = vadd.f32 0.0, %v134
  %136 = vdwg.mxu0
  %137 = vmatpush.msra.mxu0 %v76
  %138 = vmatpush.msra.mxu0 %v74
  %139 = vmatpush.msra.mxu0 %v72
  %140 = vmatpush.msra.mxu0 %v70
  %141 = vmatpush.msra.mxu0 %v68
  %142 = vmatpush.msra.mxu0 %v66
  %143 = vmatpush.msra.mxu0 %v64
  %144 = vmatpush.msra.mxu0 %v62
  %145 = vmatpush.msra.mxu0 %v60
  %146 = vmatpush.msra.mxu0 %v58
  %147 = vmatpush.msra.mxu0 %v56
  %148 = vmatpush.msra.mxu0 %v54
  %149 = vmatpush.msra.mxu0 %v52
  %150 = vmatpush.msra.mxu0 %v50
  %151 = vmatpush.msra.mxu0 %v48
  %152 = vmatpush.msra.mxu0 %v46
  %153 = vmatmul.f32.gmra.mxu0 %v12
  %v154 = vpop.f32.mrf.mxu0
  %v155 = vadd.f32 %v135, %v154
  %156 = vdwg.mxu0
  %157 = vst [vmem:[%s2] sm:$0xff] %v115
  %158 = vst [vmem:[%s2 + $0x8] sm:$0xff] %v155
  // Predicated region
  $region10: #{cgf_forward.1} parent=0 // pred_check
    _
  $region11: #{cgf_forward.1} parent=0 // pred_check_branch
    %160 = sbr.rel (0) target = $region13
  $region12: #{cgf_forward.1} parent=0 // pred_region
    _
  $region13: #{cgf_forward.1} parent=0 // pred_fallthru
    _
  // Predicated region
  $region14: #{cgf_forward.1} parent=0 // pred_check
    _
  $region15: #{cgf_forward.1} parent=0 // pred_check_branch
    %162 = sbr.rel (0) target = $region17
  $region16: #{cgf_forward.1} parent=0 // pred_region
    _
  $region17: #{cgf_forward.1} parent=0 // pred_fallthru
    _

</llo_original>
